<compile_context>
chip_gen: v5e
topology: v5e:2x2
jax: 0.10.0
libtpu: 0.0.40
codegen_flags: <defaults>
</compile_context>

<pallas_src>
import functools
import math

import jax
import jax.numpy as jnp
from jax.experimental import pallas as pl
from jax.experimental.pallas import tpu as pltpu

_EPS = 1e-5


def _ln_rows_kernel(x_ref, w_ref, b_ref, o_ref, *, inv_c):
    # x_ref: (rt, C) tile of rows; w_ref/b_ref: (1, C). One row = one group.
    x = x_ref[...].astype(jnp.float32)
    mu = jnp.sum(x, axis=-1, keepdims=True) * inv_c
    xc = x - mu
    var = jnp.sum(xc * xc, axis=-1, keepdims=True) * inv_c   # two-pass, like torch
    inv = jax.lax.rsqrt(var + _EPS)
    w = w_ref[...].astype(jnp.float32)
    b = b_ref[...].astype(jnp.float32)
    o_ref[...] = (xc * inv * w + b).astype(o_ref.dtype)


def _ln_packed_kernel(x_ref, w_ref, b_ref, p_ref, o_ref, *, inv_c):
    # Lane-dense path for small C: k = 128/gcd(C,128) original rows are packed
    # along the lane axis, so the tile is (rt, W) with W = k*C a multiple of 128.
    # p_ref is the (W, W) block-diagonal ones matrix; x @ P yields each C-wide
    # segment's sum broadcast back across that segment (MXU is idle here, so the
    # matmuls are free; HIGHEST precision avoids bf16 rounding in the variance).
    x = x_ref[...].astype(jnp.float32)
    p = p_ref[...]
    mu = jnp.dot(x, p, preferred_element_type=jnp.float32,
                 precision=jax.lax.Precision.HIGHEST) * inv_c
    xc = x - mu
    var = jnp.dot(xc * xc, p, preferred_element_type=jnp.float32,
                  precision=jax.lax.Precision.HIGHEST) * inv_c
    inv = jax.lax.rsqrt(var + _EPS)
    w = w_ref[...].astype(jnp.float32)
    b = b_ref[...].astype(jnp.float32)
    o_ref[...] = (xc * inv * w + b).astype(o_ref.dtype)


def _tpu_params():
    """(vmem_capacity_bytes, num_tensorcores) with conservative fallbacks."""
    vmem_capacity = 64 * 1024 * 1024   # smallest across generations (v7x)
    num_cores = 1
    try:
        info = pltpu.get_tpu_info()
        vmem_capacity = int(getattr(info, "vmem_capacity_bytes", vmem_capacity))
        for attr in ("num_cores", "core_count", "num_tensorcores", "tensorcore_count"):
            v = getattr(info, attr, None)
            if v:
                num_cores = int(v)
                break
    except Exception:
        pass
    if num_cores <= 1:
        try:
            if "v7" in jax.devices()[0].device_kind.lower():
                num_cores = 2
        except Exception:
            pass
    return vmem_capacity, max(1, num_cores)


def _choose_row_tile(rows, lane_width, itemsize, vmem_budget, num_cores,
                     target_tile_bytes):
    """Pick the row tile so each input tile is ~target_tile_bytes, within VMEM."""
    # Sublane packing of the I/O dtype: f32 -> 8 rows, bf16 -> 16, int8/fp8 -> 32.
    row_align = 8 * max(1, 4 // itemsize)
    # Per-row VMEM: double-buffered in + out tiles plus ~5 full-width f32 temps
    # (x_f32, centered, squared, stats/matmul results, output expression).
    bytes_per_row = lane_width * (4 * itemsize + 5 * 4)
    max_rows = max(row_align, (vmem_budget // bytes_per_row) // row_align * row_align)
    tgt_rows = max(row_align,
                   (target_tile_bytes // (lane_width * itemsize)) // row_align * row_align)
    rt = min(tgt_rows, max_rows)

    if rows <= rt:
        # Whole problem fits in a single tile.
        if num_cores > 1 and rows >= 2 * row_align:
            # Split in two so both TensorCores (v7x) get a block.
            return pl.cdiv(pl.cdiv(rows, 2), row_align) * row_align
        return rows                      # one step; block dim == full array dim

    rt = max(row_align, (rt // row_align) * row_align)
    if num_cores > 1:
        # Keep the grid-step count a multiple of the core count for balance.
        steps = pl.cdiv(rows, rt)
        if steps % num_cores:
            steps = pl.cdiv(steps, num_cores) * num_cores
            rt = max(row_align, pl.cdiv(pl.cdiv(rows, steps), row_align) * row_align)
    return rt


def with_bias_layernorm(x, weight, bias, *, target_tile_bytes=8 * 1024 * 1024):
    """LayerNorm over the last axis of `x` with affine weight/bias (eps=1e-5)."""
    orig_shape = x.shape
    C = orig_shape[-1]
    assert weight.shape == (C,) and bias.shape == (C,)

    x2d = x.reshape(-1, C)               # contiguous reshape: free, no HBM pass
    M = x2d.shape[0]
    itemsize = jnp.dtype(x.dtype).itemsize

    vmem_capacity, num_cores = _tpu_params()
    # Buffer budget: ~3/4 of VMEM on 128-MiB parts (v5e/v6e), ~40 MiB on 64-MiB v7x.
    vmem_budget = max(min(vmem_capacity * 3 // 4, vmem_capacity - 24 * 1024 * 1024),
                      vmem_capacity // 2)

    # Lane-dense packing for small C: pack k rows so W = k*C is a multiple of 128.
    k = (128 // math.gcd(C, 128)) if C < 128 else 1
    W = k * C
    use_packed = (C < 128) and (W <= 512) and (M >= k)

    pad_rows = 0
    if use_packed:
        if M % k:
            pad_rows = k - (M % k)
            # One-time wrapper pad for ragged M (keeps lane-dense stores).
            x2d = jnp.pad(x2d, ((0, pad_rows), (0, 0)))
        rows = (M + pad_rows) // k
        xw = x2d.reshape(rows, W)         # contiguous reshape: free
        w_in = jnp.tile(weight, k).reshape(1, W)
        b_in = jnp.tile(bias, k).reshape(1, W)
        seg = jnp.arange(W, dtype=jnp.int32) // C
        p_mat = (seg[:, None] == seg[None, :]).astype(jnp.float32)
        kernel = functools.partial(_ln_packed_kernel, inv_c=1.0 / C)
        vmem_budget -= 2 * W * W * 4      # double-buffered block-diagonal matrix
    else:
        rows, W = M, C
        xw = x2d
        w_in = weight.reshape(1, C)
        b_in = bias.reshape(1, C)
        p_mat = None
        kernel = functools.partial(_ln_rows_kernel, inv_c=1.0 / C)

    rt = _choose_row_tile(rows, W, itemsize, vmem_budget, num_cores, target_tile_bytes)
    grid = (pl.cdiv(rows, rt),)           # ragged tail handled by Pallas (masked writes)

    io_bytes = 4 * rt * W * itemsize      # double-buffered input + output tiles
    tmp_bytes = 5 * rt * W * 4            # full-width f32 intermediates
    pmat_bytes = (2 * W * W * 4) if use_packed else 0
    vmem_limit = io_bytes + tmp_bytes + pmat_bytes + 8 * 1024 * 1024
    vmem_limit = max(vmem_limit, 32 * 1024 * 1024)
    vmem_limit = int(min(vmem_limit, vmem_capacity - 8 * 1024 * 1024))

    in_specs = [
        pl.BlockSpec((rt, W), lambda i: (i, 0)),
        pl.BlockSpec((1, W), lambda i: (0, 0)),
        pl.BlockSpec((1, W), lambda i: (0, 0)),
    ]
    args = [xw, w_in, b_in]
    if use_packed:
        in_specs.append(pl.BlockSpec((W, W), lambda i: (0, 0)))
        args.append(p_mat)

    out = pl.pallas_call(
        kernel,
        out_shape=jax.ShapeDtypeStruct((rows, W), x.dtype),
        grid_spec=pltpu.PrefetchScalarGridSpec(
            num_scalar_prefetch=0,
            grid=grid,
            in_specs=in_specs,
            out_specs=pl.BlockSpec((rt, W), lambda i: (i, 0)),
        ),
        compiler_params=pltpu.CompilerParams(
            dimension_semantics=("parallel",),
            vmem_limit_bytes=vmem_limit,
        ),
    )(*args)

    if pad_rows:
        out = out.reshape(M + pad_rows, C)[:M]
    return out.reshape(orig_shape)


if __name__ == "__main__":
    key = jax.random.PRNGKey(0)
    # Shapes consistent with how TTST uses WithBias_LayerNorm: tokens x channels.
    B, HW, C = 2, 64, 32
    x = jax.random.normal(key, (B, HW, C), dtype=jnp.float32)

    # Deterministic parameter init matching the module's __init__:
    # weight = ones(C), bias = zeros(C).
    weight = jnp.ones((C,), dtype=jnp.float32)
    bias = jnp.zeros((C,), dtype=jnp.float32)

    y = with_bias_layernorm(x, weight, bias)
    y = jax.block_until_ready(y)

    # Sanity check against a plain-JAX reference (same semantics as the torch module).
    mu = jnp.mean(x, axis=-1, keepdims=True)
    var = jnp.mean((x - mu) ** 2, axis=-1, keepdims=True)
    ref = (x - mu) / jnp.sqrt(var + 1e-5) * weight + bias
    assert jnp.allclose(y, ref, atol=1e-4, rtol=1e-4)

    print("KERNEL_OK")
</pallas_src>

<mosaic_0001>
module attributes {stable_mosaic.version = 11 : i64} {
  func.func @_ln_packed_kernel(%arg0: i32, %arg1: memref<32x128xf32, #tpu.memory_space<vmem>>, %arg2: memref<1x128xf32, #tpu.memory_space<vmem>>, %arg3: memref<1x128xf32, #tpu.memory_space<vmem>>, %arg4: memref<128x128xf32, #tpu.memory_space<vmem>>, %arg5: memref<32x128xf32, #tpu.memory_space<vmem>>) attributes {dimension_semantics = [#tpu.dimension_semantics<parallel>], iteration_bounds = array<i64: 1>, scalar_prefetch = 0 : i64, scratch_operands = 0 : i64, tpu.core_type = #tpu.core_type<tc>, window_params = [{transform_indices = @transform_0, window_bounds = array<i64: 32, 128>}, {pipeline_mode = #tpu.pipeline_mode<synchronous>, transform_indices = @transform_1, window_bounds = array<i64: 1, 128>}, {pipeline_mode = #tpu.pipeline_mode<synchronous>, transform_indices = @transform_2, window_bounds = array<i64: 1, 128>}, {pipeline_mode = #tpu.pipeline_mode<synchronous>, transform_indices = @transform_3, window_bounds = array<i64: 128, 128>}, {transform_indices = @transform_4, window_bounds = array<i64: 32, 128>}]} {
    %c0 = arith.constant 0 : index
    %c0_0 = arith.constant 0 : index
    %0 = vector.load %arg1[%c0, %c0_0] : memref<32x128xf32, #tpu.memory_space<vmem>>, vector<32x128xf32>
    %c0_1 = arith.constant 0 : index
    %c0_2 = arith.constant 0 : index
    %1 = vector.load %arg4[%c0_1, %c0_2] : memref<128x128xf32, #tpu.memory_space<vmem>>, vector<128x128xf32>
    %cst = arith.constant dense<0.000000e+00> : vector<32x128xf32>
    %2 = tpu.matmul %0, %1, %cst {dimension_numbers = #tpu.dot_dimension_numbers<[1], [0], [0], [1], [0, 0, 1, 1], [], []>, precision = #tpu.contract_precision<fp32>} : vector<32x128xf32>, vector<128x128xf32>, vector<32x128xf32> -> vector<32x128xf32>
    %cst_3 = arith.constant 3.125000e-02 : f32
    %3 = vector.broadcast %cst_3 : f32 to vector<32x128xf32>
    %4 = arith.mulf %2, %3 : vector<32x128xf32>
    %5 = arith.subf %0, %4 : vector<32x128xf32>
    %6 = arith.mulf %5, %5 : vector<32x128xf32>
    %cst_4 = arith.constant dense<0.000000e+00> : vector<32x128xf32>
    %7 = tpu.matmul %6, %1, %cst_4 {dimension_numbers = #tpu.dot_dimension_numbers<[1], [0], [0], [1], [0, 0, 1, 1], [], []>, precision = #tpu.contract_precision<fp32>} : vector<32x128xf32>, vector<128x128xf32>, vector<32x128xf32> -> vector<32x128xf32>
    %cst_5 = arith.constant 3.125000e-02 : f32
    %8 = vector.broadcast %cst_5 : f32 to vector<32x128xf32>
    %9 = arith.mulf %7, %8 : vector<32x128xf32>
    %cst_6 = arith.constant 9.99999974E-6 : f32
    %10 = vector.broadcast %cst_6 : f32 to vector<32x128xf32>
    %11 = arith.addf %9, %10 : vector<32x128xf32>
    %12 = math.rsqrt %11 : vector<32x128xf32>
    %c0_7 = arith.constant 0 : index
    %c0_8 = arith.constant 0 : index
    %13 = vector.load %arg2[%c0_7, %c0_8] : memref<1x128xf32, #tpu.memory_space<vmem>>, vector<1x128xf32>
    %c0_9 = arith.constant 0 : index
    %c0_10 = arith.constant 0 : index
    %14 = vector.load %arg3[%c0_9, %c0_10] : memref<1x128xf32, #tpu.memory_space<vmem>>, vector<1x128xf32>
    %15 = arith.mulf %5, %12 : vector<32x128xf32>
    %16 = vector.broadcast %13 : vector<1x128xf32> to vector<32x128xf32>
    %17 = arith.mulf %15, %16 : vector<32x128xf32>
    %18 = vector.broadcast %14 : vector<1x128xf32> to vector<32x128xf32>
    %19 = arith.addf %17, %18 : vector<32x128xf32>
    %c0_11 = arith.constant 0 : index
    %c0_12 = arith.constant 0 : index
    %20 = vector.load %arg5[%c0_11, %c0_12] : memref<32x128xf32, #tpu.memory_space<vmem>>, vector<32x128xf32>
    tpu.vector_store %arg5[%c0_11, %c0_12], %19 {strides = array<i32>} : memref<32x128xf32, #tpu.memory_space<vmem>>, vector<32x128xf32>,
    return
  }
  func.func @transform_0(%arg0: i32) -> (i32, i32) {
    %c0_i32 = arith.constant 0 : i32
    %c0_i32_0 = arith.constant 0 : i32
    return %arg0, %c0_i32 : i32, i32
  }
  func.func @transform_1(%arg0: i32) -> (i32, i32) {
    %c0_i32 = arith.constant 0 : i32
    %c0_i32_0 = arith.constant 0 : i32
    %c0_i32_1 = arith.constant 0 : i32
    return %c0_i32, %c0_i32_0 : i32, i32
  }
  func.func @transform_2(%arg0: i32) -> (i32, i32) {
    %c0_i32 = arith.constant 0 : i32
    %c0_i32_0 = arith.constant 0 : i32
    %c0_i32_1 = arith.constant 0 : i32
    return %c0_i32, %c0_i32_0 : i32, i32
  }
  func.func @transform_3(%arg0: i32) -> (i32, i32) {
    %c0_i32 = arith.constant 0 : i32
    %c0_i32_0 = arith.constant 0 : i32
    %c0_i32_1 = arith.constant 0 : i32
    return %c0_i32, %c0_i32_0 : i32, i32
  }
  func.func @transform_4(%arg0: i32) -> (i32, i32) {
    %c0_i32 = arith.constant 0 : i32
    %c0_i32_0 = arith.constant 0 : i32
    return %arg0, %c0_i32 : i32, i32
  }
}

</mosaic_0001>

<llo_original>
// kernel: tpu_custom_call.1
$region0: #{tpu_custom_call.1}
  #allocation0 [shape = 'u32[]', space=smem, size = 0x4, offset = 0x4, fixed_abs, tag = 'smem constant byte address 0x4 - core index']
  #allocation1 [shape = 'u32[72,128]{1,0:T(1,128)}', space=vmem, size = 0x9000, scoped, tag = 'internal scratch']
  %s0 = inlined_call_operand.hbm [shape: f32[32,128], index: 0, kind: input, shape index: {}]
  %s1 = inlined_call_operand.hbm [shape: f32[1,128], index: 1, kind: input, shape index: {}]
  %s2 = inlined_call_operand.vmem [shape: f32[1,128], index: 2, kind: input, shape index: {}]
  %s3 = inlined_call_operand.hbm [shape: f32[128,128], index: 3, kind: input, shape index: {}]
  %s4 = inlined_call_operand.hbm [shape: f32[32,128], index: 4, kind: output, shape index: {}]
  %s5 = sld [smem:[#allocation0]]
  $region38: #{tpu_custom_call.1} parent=0
    _
  %s7 = ssub.s32 1, %s5
  %s8 = scalar_select 0, %s7, %s5
  $region1: #{tpu_custom_call.1} parent=0
    #allocation2 [shape = 'u8[16384]{0}', space=vmem, size = 0x4000, scoped, tag = 'input window, operand 0, single buffered']
    #allocation3 [shape = 's32[1]{0}', space=sflag, size = 0x4, scoped, tag = 'scoped memory for tpu_custom_call.1']
    #allocation4 [shape = 's32[1]{0}', space=sflag, size = 0x4, scoped, tag = 'scoped memory for tpu_custom_call.1']
    #allocation5 [shape = 'u8[512]{0}', space=vmem, size = 0x400, scoped, tag = 'input window, operand 1, single buffered']
    #allocation6 [shape = 's32[1]{0}', space=sflag, size = 0x4, scoped, tag = 'scoped memory for tpu_custom_call.1']
    #allocation7 [shape = 'u8[65536]{0}', space=vmem, size = 0x10000, scoped, tag = 'input window, operand 3, single buffered']
    #allocation8 [shape = 'u8[16384]{0}', space=vmem, size = 0x4000, scoped, tag = 'output window, operand 0, single buffered']
    %9 = vsyncpa [#allocation3], 0
    %10 = vsyncpa [#allocation6], 0
    %11 = vsyncpa [#allocation4], 0
    // Predicated region
    $region2: #{tpu_custom_call.1} parent=1 // pred_check
      _
    $region3: #{tpu_custom_call.1} parent=1 // pred_check_branch
      %13 = sbr.rel (0) target = $region5
    $region4: #{tpu_custom_call.1} parent=1 // pred_region
      %15 = vsyncadd [#allocation3], 0
      %s16 = sshll.u32 %s0, 4
      %s17 = int_to_ptr.hbm [resolvable:$true] %s16
      %s18 = sshll.u32 [#allocation2], 4
      %s19 = int_to_ptr.vmem [resolvable:$true] %s18
      %24 = dma.hbm_to_vmem [thread:$0]  %s17, 512, %s19, [#allocation3], 128, 128, 8
    $region5: #{tpu_custom_call.1} parent=1 // pred_fallthru
      _
    // Predicated region
    $region6: #{tpu_custom_call.1} parent=1 // pred_check
      _
    $region7: #{tpu_custom_call.1} parent=1 // pred_check_branch
      %26 = sbr.rel (0) target = $region9
    $region8: #{tpu_custom_call.1} parent=1 // pred_region
      %28 = vsyncadd [#allocation6], 0
      %s30 = sshll.u32 %s1, 4
      %s31 = int_to_ptr.hbm [resolvable:$true] %s30
      %s32 = sshll.u32 [#allocation5], 4
      %s33 = int_to_ptr.vmem [resolvable:$true] %s32
      %35 = dma.hbm_to_vmem [thread:$0]  %s31, 16, %s33, [#allocation6]
    $region9: #{tpu_custom_call.1} parent=1 // pred_fallthru
      _
    // Predicated region
    $region10: #{tpu_custom_call.1} parent=1 // pred_check
      _
    $region11: #{tpu_custom_call.1} parent=1 // pred_check_branch
      %37 = sbr.rel (0) target = $region13
    $region12: #{tpu_custom_call.1} parent=1 // pred_region
      _
    $region13: #{tpu_custom_call.1} parent=1 // pred_fallthru
      _
    // Predicated region
    $region14: #{tpu_custom_call.1} parent=1 // pred_check
      _
    $region15: #{tpu_custom_call.1} parent=1 // pred_check_branch
      %39 = sbr.rel (0) target = $region17
    $region16: #{tpu_custom_call.1} parent=1 // pred_region
      %41 = vsyncadd [#allocation6], 0
      %s42 = sshll.u32 %s3, 4
      %s43 = int_to_ptr.hbm [resolvable:$true] %s42
      %s44 = sshll.u32 [#allocation7], 4
      %s45 = int_to_ptr.vmem [resolvable:$true] %s44
      %50 = dma.hbm_to_vmem [thread:$0]  %s43, 2048, %s45, [#allocation6], 128, 128, 8
    $region17: #{tpu_custom_call.1} parent=1 // pred_fallthru
      _
    // Predicated region
    $region18: #{tpu_custom_call.1} parent=1 // pred_check
      _
    $region19: #{tpu_custom_call.1} parent=1 // pred_check_branch
      %52 = sbr.rel (0) target = $region21
    $region20: #{tpu_custom_call.1} parent=1 // pred_region
      %54 = dma.done [#allocation3], 512
    $region21: #{tpu_custom_call.1} parent=1 // pred_fallthru
      _
    // Predicated region
    $region22: #{tpu_custom_call.1} parent=1 // pred_check
      _
    $region23: #{tpu_custom_call.1} parent=1 // pred_check_branch
      %56 = sbr.rel (0) target = $region25
    $region24: #{tpu_custom_call.1} parent=1 // pred_region
      %58 = dma.done [#allocation6], 16
    $region25: #{tpu_custom_call.1} parent=1 // pred_fallthru
      _
    // Predicated region
    $region26: #{tpu_custom_call.1} parent=1 // pred_check
      _
    $region27: #{tpu_custom_call.1} parent=1 // pred_check_branch
      %60 = sbr.rel (0) target = $region29
    $region28: #{tpu_custom_call.1} parent=1 // pred_region
      %62 = dma.done [#allocation6], 2048
    $region29: #{tpu_custom_call.1} parent=1 // pred_fallthru
      _
    %v63 = vld [vmem:[#allocation2] sm:$0xff]
    %v64 = vld [vmem:[#allocation2 + $0x8] sm:$0xff]
    %v65 = vld [vmem:[#allocation2 + $0x10] sm:$0xff]
    %v66 = vld [vmem:[#allocation2 + $0x18] sm:$0xff]
    %v67 = vld [vmem:[#allocation7] sm:$0xff]
    %v68 = vld [vmem:[#allocation7 + $0x8] sm:$0xff]
    %v69 = vld [vmem:[#allocation7 + $0x10] sm:$0xff]
    %v70 = vld [vmem:[#allocation7 + $0x18] sm:$0xff]
    %v71 = vld [vmem:[#allocation7 + $0x20] sm:$0xff]
    %v72 = vld [vmem:[#allocation7 + $0x28] sm:$0xff]
    %v73 = vld [vmem:[#allocation7 + $0x30] sm:$0xff]
    %v74 = vld [vmem:[#allocation7 + $0x38] sm:$0xff]
    %v75 = vld [vmem:[#allocation7 + $0x40] sm:$0xff]
    %v76 = vld [vmem:[#allocation7 + $0x48] sm:$0xff]
    %v77 = vld [vmem:[#allocation7 + $0x50] sm:$0xff]
    %v78 = vld [vmem:[#allocation7 + $0x58] sm:$0xff]
    %v79 = vld [vmem:[#allocation7 + $0x60] sm:$0xff]
    %v80 = vld [vmem:[#allocation7 + $0x68] sm:$0xff]
    %v81 = vld [vmem:[#allocation7 + $0x70] sm:$0xff]
    %v82 = vld [vmem:[#allocation7 + $0x78] sm:$0xff]
    %v83 = vand.u32 %v82, 4294901760
    %84 = vmatpush.msra.mxu0 %v83
    %v85 = vand.u32 %v81, 4294901760
    %86 = vmatpush.msra.mxu0 %v85
    %v87 = vand.u32 %v80, 4294901760
    %88 = vmatpush.msra.mxu0 %v87
    %v89 = vand.u32 %v79, 4294901760
    %90 = vmatpush.msra.mxu0 %v89
    %v91 = vand.u32 %v78, 4294901760
    %92 = vmatpush.msra.mxu0 %v91
    %v93 = vand.u32 %v77, 4294901760
    %94 = vmatpush.msra.mxu0 %v93
    %v95 = vand.u32 %v76, 4294901760
    %96 = vmatpush.msra.mxu0 %v95
    %v97 = vand.u32 %v75, 4294901760
    %98 = vmatpush.msra.mxu0 %v97
    %v99 = vand.u32 %v74, 4294901760
    %100 = vmatpush.msra.mxu0 %v99
    %v101 = vand.u32 %v73, 4294901760
    %102 = vmatpush.msra.mxu0 %v101
    %v103 = vand.u32 %v72, 4294901760
    %104 = vmatpush.msra.mxu0 %v103
    %v105 = vand.u32 %v71, 4294901760
    %106 = vmatpush.msra.mxu0 %v105
    %v107 = vand.u32 %v70, 4294901760
    %108 = vmatpush.msra.mxu0 %v107
    %v109 = vand.u32 %v69, 4294901760
    %110 = vmatpush.msra.mxu0 %v109
    %v111 = vand.u32 %v68, 4294901760
    %112 = vmatpush.msra.mxu0 %v111
    %v113 = vand.u32 %v67, 4294901760
    %114 = vmatpush.msra.mxu0 %v113
    %v115 = vand.u32 %v63, 4294901760
    %v116 = vsub.f32 %v63, %v115
    %v117 = vand.u32 %v116, 4294901760
    %v118 = vsub.f32 %v116, %v117
    %v119 = vand.u32 %v118, 4294901760
    %120 = vmatmul.f32.gmra.mxu0 %v119
    %v121 = vpop.f32.mrf.mxu0
    %v122 = vadd.f32 0.0, %v121
    %v123 = vand.u32 %v64, 4294901760
    %v124 = vsub.f32 %v64, %v123
    %v125 = vand.u32 %v124, 4294901760
    %v126 = vsub.f32 %v124, %v125
    %v127 = vand.u32 %v126, 4294901760
    %128 = vmatmul.f32.gmra.mxu0 %v127
    %v129 = vpop.f32.mrf.mxu0
    %v130 = vadd.f32 0.0, %v129
    %v131 = vand.u32 %v65, 4294901760
    %v132 = vsub.f32 %v65, %v131
    %v133 = vand.u32 %v132, 4294901760
    %v134 = vsub.f32 %v132, %v133
    %v135 = vand.u32 %v134, 4294901760
    %136 = vmatmul.f32.gmra.mxu0 %v135
    %v137 = vpop.f32.mrf.mxu0
    %v138 = vadd.f32 0.0, %v137
    %v139 = vand.u32 %v66, 4294901760
    %v140 = vsub.f32 %v66, %v139
    %v141 = vand.u32 %v140, 4294901760
    %v142 = vsub.f32 %v140, %v141
    %v143 = vand.u32 %v142, 4294901760
    %144 = vmatmul.f32.gmra.mxu0 %v143
    %v145 = vpop.f32.mrf.mxu0
    %v146 = vadd.f32 0.0, %v145
    %147 = vdwg.mxu0
    %v148 = vand.u32 %v82, 4294901760
    %v149 = vsub.f32 %v82, %v148
    %v150 = vand.u32 %v149, 4294901760
    %v151 = vsub.f32 %v149, %v150
    %v152 = vand.u32 %v151, 4294901760
    %153 = vmatpush.msra.mxu0 %v152
    %v154 = vand.u32 %v81, 4294901760
    %v155 = vsub.f32 %v81, %v154
    %v156 = vand.u32 %v155, 4294901760
    %v157 = vsub.f32 %v155, %v156
    %v158 = vand.u32 %v157, 4294901760
    %159 = vmatpush.msra.mxu0 %v158
    %v160 = vand.u32 %v80, 4294901760
    %v161 = vsub.f32 %v80, %v160
    %v162 = vand.u32 %v161, 4294901760
    %v163 = vsub.f32 %v161, %v162
    %v164 = vand.u32 %v163, 4294901760
    %165 = vmatpush.msra.mxu0 %v164
    %v166 = vand.u32 %v79, 4294901760
    %v167 = vsub.f32 %v79, %v166
    %v168 = vand.u32 %v167, 4294901760
    %v169 = vsub.f32 %v167, %v168
    %v170 = vand.u32 %v169, 4294901760
    %171 = vmatpush.msra.mxu0 %v170
    %v172 = vand.u32 %v78, 4294901760
    %v173 = vsub.f32 %v78, %v172
    %v174 = vand.u32 %v173, 4294901760
    %v175 = vsub.f32 %v173, %v174
    %v176 = vand.u32 %v175, 4294901760
    %177 = vmatpush.msra.mxu0 %v176
    %v178 = vand.u32 %v77, 4294901760
    %v179 = vsub.f32 %v77, %v178
    %v180 = vand.u32 %v179, 4294901760
    %v181 = vsub.f32 %v179, %v180
    %v182 = vand.u32 %v181, 4294901760
    %183 = vmatpush.msra.mxu0 %v182
    %v184 = vand.u32 %v76, 4294901760
    %v185 = vsub.f32 %v76, %v184
    %v186 = vand.u32 %v185, 4294901760
    %v187 = vsub.f32 %v185, %v186
    %v188 = vand.u32 %v187, 4294901760
    %189 = vmatpush.msra.mxu0 %v188
    %v190 = vand.u32 %v75, 4294901760
    %v191 = vsub.f32 %v75, %v190
    %v192 = vand.u32 %v191, 4294901760
    %v193 = vsub.f32 %v191, %v192
    %v194 = vand.u32 %v193, 4294901760
    %195 = vmatpush.msra.mxu0 %v194
    %v196 = vand.u32 %v74, 4294901760
    %v197 = vsub.f32 %v74, %v196
    %v198 = vand.u32 %v197, 4294901760
    %v199 = vsub.f32 %v197, %v198
    %v200 = vand.u32 %v199, 4294901760
    %201 = vmatpush.msra.mxu0 %v200
    %v202 = vand.u32 %v73, 4294901760
    %v203 = vsub.f32 %v73, %v202
    %v204 = vand.u32 %v203, 4294901760
    %v205 = vsub.f32 %v203, %v204
    %v206 = vand.u32 %v205, 4294901760
    %207 = vmatpush.msra.mxu0 %v206
    %v208 = vand.u32 %v72, 4294901760
    %v209 = vsub.f32 %v72, %v208
    %v210 = vand.u32 %v209, 4294901760
    %v211 = vsub.f32 %v209, %v210
    %v212 = vand.u32 %v211, 4294901760
    %213 = vmatpush.msra.mxu0 %v212
    %v214 = vand.u32 %v71, 4294901760
    %v215 = vsub.f32 %v71, %v214
    %v216 = vand.u32 %v215, 4294901760
    %v217 = vsub.f32 %v215, %v216
    %v218 = vand.u32 %v217, 4294901760
    %219 = vmatpush.msra.mxu0 %v218
    %v220 = vand.u32 %v70, 4294901760
    %v221 = vsub.f32 %v70, %v220
    %v222 = vand.u32 %v221, 4294901760
    %v223 = vsub.f32 %v221, %v222
    %v224 = vand.u32 %v223, 4294901760
    %225 = vmatpush.msra.mxu0 %v224
    %v226 = vand.u32 %v69, 4294901760
    %v227 = vsub.f32 %v69, %v226
    %v228 = vand.u32 %v227, 4294901760
    %v229 = vsub.f32 %v227, %v228
    %v230 = vand.u32 %v229, 4294901760
    %231 = vmatpush.msra.mxu0 %v230
    %v232 = vand.u32 %v68, 4294901760
    %v233 = vsub.f32 %v68, %v232
    %v234 = vand.u32 %v233, 4294901760
    %v235 = vsub.f32 %v233, %v234
    %v236 = vand.u32 %v235, 4294901760
    %237 = vmatpush.msra.mxu0 %v236
    %v238 = vand.u32 %v67, 4294901760
    %v239 = vsub.f32 %v67, %v238
    %v240 = vand.u32 %v239, 4294901760
    %v241 = vsub.f32 %v239, %v240
    %v242 = vand.u32 %v241, 4294901760
    %243 = vmatpush.msra.mxu0 %v242
    %v244 = vand.u32 %v63, 4294901760
    %245 = vmatmul.f32.gmra.mxu0 %v244
    %v246 = vpop.f32.mrf.mxu0
    %v247 = vadd.f32 %v122, %v246
    %v248 = vand.u32 %v64, 4294901760
    %249 = vmatmul.f32.gmra.mxu0 %v248
    %v250 = vpop.f32.mrf.mxu0
    %v251 = vadd.f32 %v130, %v250
    %v252 = vand.u32 %v65, 4294901760
    %253 = vmatmul.f32.gmra.mxu0 %v252
    %v254 = vpop.f32.mrf.mxu0
    %v255 = vadd.f32 %v138, %v254
    %v256 = vand.u32 %v66, 4294901760
    %257 = vmatmul.f32.gmra.mxu0 %v256
    %v258 = vpop.f32.mrf.mxu0
    %v259 = vadd.f32 %v146, %v258
    %260 = vdwg.mxu0
    %v261 = vand.u32 %v82, 4294901760
    %v262 = vsub.f32 %v82, %v261
    %263 = vmatpush.msra.mxu0 %v262
    %v264 = vand.u32 %v81, 4294901760
    %v265 = vsub.f32 %v81, %v264
    %266 = vmatpush.msra.mxu0 %v265
    %v267 = vand.u32 %v80, 4294901760
    %v268 = vsub.f32 %v80, %v267
    %269 = vmatpush.msra.mxu0 %v268
    %v270 = vand.u32 %v79, 4294901760
    %v271 = vsub.f32 %v79, %v270
    %272 = vmatpush.msra.mxu0 %v271
    %v273 = vand.u32 %v78, 4294901760
    %v274 = vsub.f32 %v78, %v273
    %275 = vmatpush.msra.mxu0 %v274
    %v276 = vand.u32 %v77, 4294901760
    %v277 = vsub.f32 %v77, %v276
    %278 = vmatpush.msra.mxu0 %v277
    %v279 = vand.u32 %v76, 4294901760
    %v280 = vsub.f32 %v76, %v279
    %281 = vmatpush.msra.mxu0 %v280
    %v282 = vand.u32 %v75, 4294901760
    %v283 = vsub.f32 %v75, %v282
    %284 = vmatpush.msra.mxu0 %v283
    %v285 = vand.u32 %v74, 4294901760
    %v286 = vsub.f32 %v74, %v285
    %287 = vmatpush.msra.mxu0 %v286
    %v288 = vand.u32 %v73, 4294901760
    %v289 = vsub.f32 %v73, %v288
    %290 = vmatpush.msra.mxu0 %v289
    %v291 = vand.u32 %v72, 4294901760
    %v292 = vsub.f32 %v72, %v291
    %293 = vmatpush.msra.mxu0 %v292
    %v294 = vand.u32 %v71, 4294901760
    %v295 = vsub.f32 %v71, %v294
    %296 = vmatpush.msra.mxu0 %v295
    %v297 = vand.u32 %v70, 4294901760
    %v298 = vsub.f32 %v70, %v297
    %299 = vmatpush.msra.mxu0 %v298
    %v300 = vand.u32 %v69, 4294901760
    %v301 = vsub.f32 %v69, %v300
    %302 = vmatpush.msra.mxu0 %v301
    %v303 = vand.u32 %v68, 4294901760
    %v304 = vsub.f32 %v68, %v303
    %305 = vmatpush.msra.mxu0 %v304
    %v306 = vand.u32 %v67, 4294901760
    %v307 = vsub.f32 %v67, %v306
    %308 = vmatpush.msra.mxu0 %v307
    %v309 = vand.u32 %v63, 4294901760
    %v310 = vsub.f32 %v63, %v309
    %311 = vmatmul.f32.gmra.mxu0 %v310
    %v312 = vpop.f32.mrf.mxu0
    %v313 = vadd.f32 %v247, %v312
    %v314 = vand.u32 %v64, 4294901760
    %v315 = vsub.f32 %v64, %v314
    %316 = vmatmul.f32.gmra.mxu0 %v315
    %v317 = vpop.f32.mrf.mxu0
    %v318 = vadd.f32 %v251, %v317
    %v319 = vand.u32 %v65, 4294901760
    %v320 = vsub.f32 %v65, %v319
    %321 = vmatmul.f32.gmra.mxu0 %v320
    %v322 = vpop.f32.mrf.mxu0
    %v323 = vadd.f32 %v255, %v322
    %v324 = vand.u32 %v66, 4294901760
    %v325 = vsub.f32 %v66, %v324
    %326 = vmatmul.f32.gmra.mxu0 %v325
    %v327 = vpop.f32.mrf.mxu0
    %v328 = vadd.f32 %v259, %v327
    %329 = vdwg.mxu0
    %v330 = vand.u32 %v82, 4294901760
    %331 = vmatpush.msra.mxu0 %v330
    %v332 = vand.u32 %v81, 4294901760
    %333 = vmatpush.msra.mxu0 %v332
    %v334 = vand.u32 %v80, 4294901760
    %335 = vmatpush.msra.mxu0 %v334
    %v336 = vand.u32 %v79, 4294901760
    %337 = vmatpush.msra.mxu0 %v336
    %v338 = vand.u32 %v78, 4294901760
    %339 = vmatpush.msra.mxu0 %v338
    %v340 = vand.u32 %v77, 4294901760
    %341 = vmatpush.msra.mxu0 %v340
    %v342 = vand.u32 %v76, 4294901760
    %343 = vmatpush.msra.mxu0 %v342
    %v344 = vand.u32 %v75, 4294901760
    %345 = vmatpush.msra.mxu0 %v344
    %v346 = vand.u32 %v74, 4294901760
    %347 = vmatpush.msra.mxu0 %v346
    %v348 = vand.u32 %v73, 4294901760
    %349 = vmatpush.msra.mxu0 %v348
    %v350 = vand.u32 %v72, 4294901760
    %351 = vmatpush.msra.mxu0 %v350
    %v352 = vand.u32 %v71, 4294901760
    %353 = vmatpush.msra.mxu0 %v352
    %v354 = vand.u32 %v70, 4294901760
    %355 = vmatpush.msra.mxu0 %v354
    %v356 = vand.u32 %v69, 4294901760
    %357 = vmatpush.msra.mxu0 %v356
    %v358 = vand.u32 %v68, 4294901760
    %359 = vmatpush.msra.mxu0 %v358
    %v360 = vand.u32 %v67, 4294901760
    %361 = vmatpush.msra.mxu0 %v360
    %v362 = vand.u32 %v63, 4294901760
    %v363 = vsub.f32 %v63, %v362
    %v364 = vand.u32 %v363, 4294901760
    %365 = vmatmul.f32.gmra.mxu0 %v364
    %v366 = vpop.f32.mrf.mxu0
    %v367 = vadd.f32 %v313, %v366
    %v368 = vand.u32 %v64, 4294901760
    %v369 = vsub.f32 %v64, %v368
    %v370 = vand.u32 %v369, 4294901760
    %371 = vmatmul.f32.gmra.mxu0 %v370
    %v372 = vpop.f32.mrf.mxu0
    %v373 = vadd.f32 %v318, %v372
    %v374 = vand.u32 %v65, 4294901760
    %v375 = vsub.f32 %v65, %v374
    %v376 = vand.u32 %v375, 4294901760
    %377 = vmatmul.f32.gmra.mxu0 %v376
    %v378 = vpop.f32.mrf.mxu0
    %v379 = vadd.f32 %v323, %v378
    %v380 = vand.u32 %v66, 4294901760
    %v381 = vsub.f32 %v66, %v380
    %v382 = vand.u32 %v381, 4294901760
    %383 = vmatmul.f32.gmra.mxu0 %v382
    %v384 = vpop.f32.mrf.mxu0
    %v385 = vadd.f32 %v328, %v384
    %386 = vdwg.mxu0
    %v387 = vand.u32 %v82, 4294901760
    %v388 = vsub.f32 %v82, %v387
    %v389 = vand.u32 %v388, 4294901760
    %390 = vmatpush.msra.mxu0 %v389
    %v391 = vand.u32 %v81, 4294901760
    %v392 = vsub.f32 %v81, %v391
    %v393 = vand.u32 %v392, 4294901760
    %394 = vmatpush.msra.mxu0 %v393
    %v395 = vand.u32 %v80, 4294901760
    %v396 = vsub.f32 %v80, %v395
    %v397 = vand.u32 %v396, 4294901760
    %398 = vmatpush.msra.mxu0 %v397
    %v399 = vand.u32 %v79, 4294901760
    %v400 = vsub.f32 %v79, %v399
    %v401 = vand.u32 %v400, 4294901760
    %402 = vmatpush.msra.mxu0 %v401
    %v403 = vand.u32 %v78, 4294901760
    %v404 = vsub.f32 %v78, %v403
    %v405 = vand.u32 %v404, 4294901760
    %406 = vmatpush.msra.mxu0 %v405
    %v407 = vand.u32 %v77, 4294901760
    %v408 = vsub.f32 %v77, %v407
    %v409 = vand.u32 %v408, 4294901760
    %410 = vmatpush.msra.mxu0 %v409
    %v411 = vand.u32 %v76, 4294901760
    %v412 = vsub.f32 %v76, %v411
    %v413 = vand.u32 %v412, 4294901760
    %414 = vmatpush.msra.mxu0 %v413
    %v415 = vand.u32 %v75, 4294901760
    %v416 = vsub.f32 %v75, %v415
    %v417 = vand.u32 %v416, 4294901760
    %418 = vmatpush.msra.mxu0 %v417
    %v419 = vand.u32 %v74, 4294901760
    %v420 = vsub.f32 %v74, %v419
    %v421 = vand.u32 %v420, 4294901760
    %422 = vmatpush.msra.mxu0 %v421
    %v423 = vand.u32 %v73, 4294901760
    %v424 = vsub.f32 %v73, %v423
    %v425 = vand.u32 %v424, 4294901760
    %426 = vmatpush.msra.mxu0 %v425
    %v427 = vand.u32 %v72, 4294901760
    %v428 = vsub.f32 %v72, %v427
    %v429 = vand.u32 %v428, 4294901760
    %430 = vmatpush.msra.mxu0 %v429
    %v431 = vand.u32 %v71, 4294901760
    %v432 = vsub.f32 %v71, %v431
    %v433 = vand.u32 %v432, 4294901760
    %434 = vmatpush.msra.mxu0 %v433
    %v435 = vand.u32 %v70, 4294901760
    %v436 = vsub.f32 %v70, %v435
    %v437 = vand.u32 %v436, 4294901760
    %438 = vmatpush.msra.mxu0 %v437
    %v439 = vand.u32 %v69, 4294901760
    %v440 = vsub.f32 %v69, %v439
    %v441 = vand.u32 %v440, 4294901760
    %442 = vmatpush.msra.mxu0 %v441
    %v443 = vand.u32 %v68, 4294901760
    %v444 = vsub.f32 %v68, %v443
    %v445 = vand.u32 %v444, 4294901760
    %446 = vmatpush.msra.mxu0 %v445
    %v447 = vand.u32 %v67, 4294901760
    %v448 = vsub.f32 %v67, %v447
    %v449 = vand.u32 %v448, 4294901760
    %450 = vmatpush.msra.mxu0 %v449
    %v451 = vand.u32 %v63, 4294901760
    %452 = vmatmul.f32.gmra.mxu0 %v451
    %v453 = vpop.f32.mrf.mxu0
    %v454 = vadd.f32 %v367, %v453
    %v455 = vand.u32 %v64, 4294901760
    %456 = vmatmul.f32.gmra.mxu0 %v455
    %v457 = vpop.f32.mrf.mxu0
    %v458 = vadd.f32 %v373, %v457
    %v459 = vand.u32 %v65, 4294901760
    %460 = vmatmul.f32.gmra.mxu0 %v459
    %v461 = vpop.f32.mrf.mxu0
    %v462 = vadd.f32 %v379, %v461
    %v463 = vand.u32 %v66, 4294901760
    %464 = vmatmul.f32.gmra.mxu0 %v463
    %v465 = vpop.f32.mrf.mxu0
    %v466 = vadd.f32 %v385, %v465
    %467 = vdwg.mxu0
    %v468 = vand.u32 %v82, 4294901760
    %469 = vmatpush.msra.mxu0 %v468
    %v470 = vand.u32 %v81, 4294901760
    %471 = vmatpush.msra.mxu0 %v470
    %v472 = vand.u32 %v80, 4294901760
    %473 = vmatpush.msra.mxu0 %v472
    %v474 = vand.u32 %v79, 4294901760
    %475 = vmatpush.msra.mxu0 %v474
    %v476 = vand.u32 %v78, 4294901760
    %477 = vmatpush.msra.mxu0 %v476
    %v478 = vand.u32 %v77, 4294901760
    %479 = vmatpush.msra.mxu0 %v478
    %v480 = vand.u32 %v76, 4294901760
    %481 = vmatpush.msra.mxu0 %v480
    %v482 = vand.u32 %v75, 4294901760
    %483 = vmatpush.msra.mxu0 %v482
    %v484 = vand.u32 %v74, 4294901760
    %485 = vmatpush.msra.mxu0 %v484
    %v486 = vand.u32 %v73, 4294901760
    %487 = vmatpush.msra.mxu0 %v486
    %v488 = vand.u32 %v72, 4294901760
    %489 = vmatpush.msra.mxu0 %v488
    %v490 = vand.u32 %v71, 4294901760
    %491 = vmatpush.msra.mxu0 %v490
    %v492 = vand.u32 %v70, 4294901760
    %493 = vmatpush.msra.mxu0 %v492
    %v494 = vand.u32 %v69, 4294901760
    %495 = vmatpush.msra.mxu0 %v494
    %v496 = vand.u32 %v68, 4294901760
    %497 = vmatpush.msra.mxu0 %v496
    %v498 = vand.u32 %v67, 4294901760
    %499 = vmatpush.msra.mxu0 %v498
    %v500 = vand.u32 %v63, 4294901760
    %501 = vmatmul.f32.gmra.mxu0 %v500
    %v502 = vpop.f32.mrf.mxu0
    %v503 = vadd.f32 %v454, %v502
    %v504 = vand.u32 %v64, 4294901760
    %505 = vmatmul.f32.gmra.mxu0 %v504
    %v506 = vpop.f32.mrf.mxu0
    %v507 = vadd.f32 %v458, %v506
    %v508 = vand.u32 %v65, 4294901760
    %509 = vmatmul.f32.gmra.mxu0 %v508
    %v510 = vpop.f32.mrf.mxu0
    %v511 = vadd.f32 %v462, %v510
    %v512 = vand.u32 %v66, 4294901760
    %513 = vmatmul.f32.gmra.mxu0 %v512
    %v514 = vpop.f32.mrf.mxu0
    %v515 = vadd.f32 %v466, %v514
    %516 = vdwg.mxu0
    %v517 = vmul.f32 %v503, 0.03125
    %v518 = vmul.f32 %v507, 0.03125
    %v519 = vmul.f32 %v511, 0.03125
    %v520 = vmul.f32 %v515, 0.03125
    %v521 = vsub.f32 %v63, %v517
    %v522 = vsub.f32 %v64, %v518
    %v523 = vsub.f32 %v65, %v519
    %v524 = vsub.f32 %v66, %v520
    %v525 = vmul.f32 %v521, %v521
    %v526 = vmul.f32 %v522, %v522
    %v527 = vmul.f32 %v523, %v523
    %v528 = vmul.f32 %v524, %v524
    %v529 = vand.u32 %v82, 4294901760
    %530 = vmatpush.msra.mxu0 %v529
    %v531 = vand.u32 %v81, 4294901760
    %532 = vmatpush.msra.mxu0 %v531
    %v533 = vand.u32 %v80, 4294901760
    %534 = vmatpush.msra.mxu0 %v533
    %v535 = vand.u32 %v79, 4294901760
    %536 = vmatpush.msra.mxu0 %v535
    %v537 = vand.u32 %v78, 4294901760
    %538 = vmatpush.msra.mxu0 %v537
    %v539 = vand.u32 %v77, 4294901760
    %540 = vmatpush.msra.mxu0 %v539
    %v541 = vand.u32 %v76, 4294901760
    %542 = vmatpush.msra.mxu0 %v541
    %v543 = vand.u32 %v75, 4294901760
    %544 = vmatpush.msra.mxu0 %v543
    %v545 = vand.u32 %v74, 4294901760
    %546 = vmatpush.msra.mxu0 %v545
    %v547 = vand.u32 %v73, 4294901760
    %548 = vmatpush.msra.mxu0 %v547
    %v549 = vand.u32 %v72, 4294901760
    %550 = vmatpush.msra.mxu0 %v549
    %v551 = vand.u32 %v71, 4294901760
    %552 = vmatpush.msra.mxu0 %v551
    %v553 = vand.u32 %v70, 4294901760
    %554 = vmatpush.msra.mxu0 %v553
    %v555 = vand.u32 %v69, 4294901760
    %556 = vmatpush.msra.mxu0 %v555
    %v557 = vand.u32 %v68, 4294901760
    %558 = vmatpush.msra.mxu0 %v557
    %v559 = vand.u32 %v67, 4294901760
    %560 = vmatpush.msra.mxu0 %v559
    %v561 = vand.u32 %v525, 4294901760
    %v562 = vsub.f32 %v525, %v561
    %v563 = vand.u32 %v562, 4294901760
    %v564 = vsub.f32 %v562, %v563
    %v565 = vand.u32 %v564, 4294901760
    %566 = vmatmul.f32.gmra.mxu0 %v565
    %v567 = vpop.f32.mrf.mxu0
    %v568 = vadd.f32 0.0, %v567
    %v569 = vand.u32 %v526, 4294901760
    %v570 = vsub.f32 %v526, %v569
    %v571 = vand.u32 %v570, 4294901760
    %v572 = vsub.f32 %v570, %v571
    %v573 = vand.u32 %v572, 4294901760
    %574 = vmatmul.f32.gmra.mxu0 %v573
    %v575 = vpop.f32.mrf.mxu0
    %v576 = vadd.f32 0.0, %v575
    %v577 = vand.u32 %v527, 4294901760
    %v578 = vsub.f32 %v527, %v577
    %v579 = vand.u32 %v578, 4294901760
    %v580 = vsub.f32 %v578, %v579
    %v581 = vand.u32 %v580, 4294901760
    %582 = vmatmul.f32.gmra.mxu0 %v581
    %v583 = vpop.f32.mrf.mxu0
    %v584 = vadd.f32 0.0, %v583
    %v585 = vand.u32 %v528, 4294901760
    %v586 = vsub.f32 %v528, %v585
    %v587 = vand.u32 %v586, 4294901760
    %v588 = vsub.f32 %v586, %v587
    %v589 = vand.u32 %v588, 4294901760
    %590 = vmatmul.f32.gmra.mxu0 %v589
    %v591 = vpop.f32.mrf.mxu0
    %v592 = vadd.f32 0.0, %v591
    %593 = vdwg.mxu0
    %v594 = vand.u32 %v82, 4294901760
    %v595 = vsub.f32 %v82, %v594
    %v596 = vand.u32 %v595, 4294901760
    %v597 = vsub.f32 %v595, %v596
    %v598 = vand.u32 %v597, 4294901760
    %599 = vmatpush.msra.mxu0 %v598
    %v600 = vand.u32 %v81, 4294901760
    %v601 = vsub.f32 %v81, %v600
    %v602 = vand.u32 %v601, 4294901760
    %v603 = vsub.f32 %v601, %v602
    %v604 = vand.u32 %v603, 4294901760
    %605 = vmatpush.msra.mxu0 %v604
    %v606 = vand.u32 %v80, 4294901760
    %v607 = vsub.f32 %v80, %v606
    %v608 = vand.u32 %v607, 4294901760
    %v609 = vsub.f32 %v607, %v608
    %v610 = vand.u32 %v609, 4294901760
    %611 = vmatpush.msra.mxu0 %v610
    %v612 = vand.u32 %v79, 4294901760
    %v613 = vsub.f32 %v79, %v612
    %v614 = vand.u32 %v613, 4294901760
    %v615 = vsub.f32 %v613, %v614
    %v616 = vand.u32 %v615, 4294901760
    %617 = vmatpush.msra.mxu0 %v616
    %v618 = vand.u32 %v78, 4294901760
    %v619 = vsub.f32 %v78, %v618
    %v620 = vand.u32 %v619, 4294901760
    %v621 = vsub.f32 %v619, %v620
    %v622 = vand.u32 %v621, 4294901760
    %623 = vmatpush.msra.mxu0 %v622
    %v624 = vand.u32 %v77, 4294901760
    %v625 = vsub.f32 %v77, %v624
    %v626 = vand.u32 %v625, 4294901760
    %v627 = vsub.f32 %v625, %v626
    %v628 = vand.u32 %v627, 4294901760
    %629 = vmatpush.msra.mxu0 %v628
    %v630 = vand.u32 %v76, 4294901760
    %v631 = vsub.f32 %v76, %v630
    %v632 = vand.u32 %v631, 4294901760
    %v633 = vsub.f32 %v631, %v632
    %v634 = vand.u32 %v633, 4294901760
    %635 = vmatpush.msra.mxu0 %v634
    %v636 = vand.u32 %v75, 4294901760
    %v637 = vsub.f32 %v75, %v636
    %v638 = vand.u32 %v637, 4294901760
    %v639 = vsub.f32 %v637, %v638
    %v640 = vand.u32 %v639, 4294901760
    %641 = vmatpush.msra.mxu0 %v640
    %v642 = vand.u32 %v74, 4294901760
    %v643 = vsub.f32 %v74, %v642
    %v644 = vand.u32 %v643, 4294901760
    %v645 = vsub.f32 %v643, %v644
    %v646 = vand.u32 %v645, 4294901760
    %647 = vmatpush.msra.mxu0 %v646
    %v648 = vand.u32 %v73, 4294901760
    %v649 = vsub.f32 %v73, %v648
    %v650 = vand.u32 %v649, 4294901760
    %v651 = vsub.f32 %v649, %v650
    %v652 = vand.u32 %v651, 4294901760
    %653 = vmatpush.msra.mxu0 %v652
    %v654 = vand.u32 %v72, 4294901760
    %v655 = vsub.f32 %v72, %v654
    %v656 = vand.u32 %v655, 4294901760
    %v657 = vsub.f32 %v655, %v656
    %v658 = vand.u32 %v657, 4294901760
    %659 = vmatpush.msra.mxu0 %v658
    %v660 = vand.u32 %v71, 4294901760
    %v661 = vsub.f32 %v71, %v660
    %v662 = vand.u32 %v661, 4294901760
    %v663 = vsub.f32 %v661, %v662
    %v664 = vand.u32 %v663, 4294901760
    %665 = vmatpush.msra.mxu0 %v664
    %v666 = vand.u32 %v70, 4294901760
    %v667 = vsub.f32 %v70, %v666
    %v668 = vand.u32 %v667, 4294901760
    %v669 = vsub.f32 %v667, %v668
    %v670 = vand.u32 %v669, 4294901760
    %671 = vmatpush.msra.mxu0 %v670
    %v672 = vand.u32 %v69, 4294901760
    %v673 = vsub.f32 %v69, %v672
    %v674 = vand.u32 %v673, 4294901760
    %v675 = vsub.f32 %v673, %v674
    %v676 = vand.u32 %v675, 4294901760
    %677 = vmatpush.msra.mxu0 %v676
    %v678 = vand.u32 %v68, 4294901760
    %v679 = vsub.f32 %v68, %v678
    %v680 = vand.u32 %v679, 4294901760
    %v681 = vsub.f32 %v679, %v680
    %v682 = vand.u32 %v681, 4294901760
    %683 = vmatpush.msra.mxu0 %v682
    %v684 = vand.u32 %v67, 4294901760
    %v685 = vsub.f32 %v67, %v684
    %v686 = vand.u32 %v685, 4294901760
    %v687 = vsub.f32 %v685, %v686
    %v688 = vand.u32 %v687, 4294901760
    %689 = vmatpush.msra.mxu0 %v688
    %v690 = vand.u32 %v525, 4294901760
    %691 = vmatmul.f32.gmra.mxu0 %v690
    %v692 = vpop.f32.mrf.mxu0
    %v693 = vadd.f32 %v568, %v692
    %v694 = vand.u32 %v526, 4294901760
    %695 = vmatmul.f32.gmra.mxu0 %v694
    %v696 = vpop.f32.mrf.mxu0
    %v697 = vadd.f32 %v576, %v696
    %v698 = vand.u32 %v527, 4294901760
    %699 = vmatmul.f32.gmra.mxu0 %v698
    %v700 = vpop.f32.mrf.mxu0
    %v701 = vadd.f32 %v584, %v700
    %v702 = vand.u32 %v528, 4294901760
    %703 = vmatmul.f32.gmra.mxu0 %v702
    %v704 = vpop.f32.mrf.mxu0
    %v705 = vadd.f32 %v592, %v704
    %706 = vdwg.mxu0
    %v707 = vand.u32 %v82, 4294901760
    %v708 = vsub.f32 %v82, %v707
    %709 = vmatpush.msra.mxu0 %v708
    %v710 = vand.u32 %v81, 4294901760
    %v711 = vsub.f32 %v81, %v710
    %712 = vmatpush.msra.mxu0 %v711
    %v713 = vand.u32 %v80, 4294901760
    %v714 = vsub.f32 %v80, %v713
    %715 = vmatpush.msra.mxu0 %v714
    %v716 = vand.u32 %v79, 4294901760
    %v717 = vsub.f32 %v79, %v716
    %718 = vmatpush.msra.mxu0 %v717
    %v719 = vand.u32 %v78, 4294901760
    %v720 = vsub.f32 %v78, %v719
    %721 = vmatpush.msra.mxu0 %v720
    %v722 = vand.u32 %v77, 4294901760
    %v723 = vsub.f32 %v77, %v722
    %724 = vmatpush.msra.mxu0 %v723
    %v725 = vand.u32 %v76, 4294901760
    %v726 = vsub.f32 %v76, %v725
    %727 = vmatpush.msra.mxu0 %v726
    %v728 = vand.u32 %v75, 4294901760
    %v729 = vsub.f32 %v75, %v728
    %730 = vmatpush.msra.mxu0 %v729
    %v731 = vand.u32 %v74, 4294901760
    %v732 = vsub.f32 %v74, %v731
    %733 = vmatpush.msra.mxu0 %v732
    %v734 = vand.u32 %v73, 4294901760
    %v735 = vsub.f32 %v73, %v734
    %736 = vmatpush.msra.mxu0 %v735
    %v737 = vand.u32 %v72, 4294901760
    %v738 = vsub.f32 %v72, %v737
    %739 = vmatpush.msra.mxu0 %v738
    %v740 = vand.u32 %v71, 4294901760
    %v741 = vsub.f32 %v71, %v740
    %742 = vmatpush.msra.mxu0 %v741
    %v743 = vand.u32 %v70, 4294901760
    %v744 = vsub.f32 %v70, %v743
    %745 = vmatpush.msra.mxu0 %v744
    %v746 = vand.u32 %v69, 4294901760
    %v747 = vsub.f32 %v69, %v746
    %748 = vmatpush.msra.mxu0 %v747
    %v749 = vand.u32 %v68, 4294901760
    %v750 = vsub.f32 %v68, %v749
    %751 = vmatpush.msra.mxu0 %v750
    %v752 = vand.u32 %v67, 4294901760
    %v753 = vsub.f32 %v67, %v752
    %754 = vmatpush.msra.mxu0 %v753
    %v755 = vand.u32 %v525, 4294901760
    %v756 = vsub.f32 %v525, %v755
    %757 = vmatmul.f32.gmra.mxu0 %v756
    %v758 = vpop.f32.mrf.mxu0
    %v759 = vadd.f32 %v693, %v758
    %v760 = vand.u32 %v526, 4294901760
    %v761 = vsub.f32 %v526, %v760
    %762 = vmatmul.f32.gmra.mxu0 %v761
    %v763 = vpop.f32.mrf.mxu0
    %v764 = vadd.f32 %v697, %v763
    %v765 = vand.u32 %v527, 4294901760
    %v766 = vsub.f32 %v527, %v765
    %767 = vmatmul.f32.gmra.mxu0 %v766
    %v768 = vpop.f32.mrf.mxu0
    %v769 = vadd.f32 %v701, %v768
    %v770 = vand.u32 %v528, 4294901760
    %v771 = vsub.f32 %v528, %v770
    %772 = vmatmul.f32.gmra.mxu0 %v771
    %v773 = vpop.f32.mrf.mxu0
    %v774 = vadd.f32 %v705, %v773
    %775 = vdwg.mxu0
    %v776 = vand.u32 %v82, 4294901760
    %777 = vmatpush.msra.mxu0 %v776
    %v778 = vand.u32 %v81, 4294901760
    %779 = vmatpush.msra.mxu0 %v778
    %v780 = vand.u32 %v80, 4294901760
    %781 = vmatpush.msra.mxu0 %v780
    %v782 = vand.u32 %v79, 4294901760
    %783 = vmatpush.msra.mxu0 %v782
    %v784 = vand.u32 %v78, 4294901760
    %785 = vmatpush.msra.mxu0 %v784
    %v786 = vand.u32 %v77, 4294901760
    %787 = vmatpush.msra.mxu0 %v786
    %v788 = vand.u32 %v76, 4294901760
    %789 = vmatpush.msra.mxu0 %v788
    %v790 = vand.u32 %v75, 4294901760
    %791 = vmatpush.msra.mxu0 %v790
    %v792 = vand.u32 %v74, 4294901760
    %793 = vmatpush.msra.mxu0 %v792
    %v794 = vand.u32 %v73, 4294901760
    %795 = vmatpush.msra.mxu0 %v794
    %v796 = vand.u32 %v72, 4294901760
    %797 = vmatpush.msra.mxu0 %v796
    %v798 = vand.u32 %v71, 4294901760
    %799 = vmatpush.msra.mxu0 %v798
    %v800 = vand.u32 %v70, 4294901760
    %801 = vmatpush.msra.mxu0 %v800
    %v802 = vand.u32 %v69, 4294901760
    %803 = vmatpush.msra.mxu0 %v802
    %v804 = vand.u32 %v68, 4294901760
    %805 = vmatpush.msra.mxu0 %v804
    %v806 = vand.u32 %v67, 4294901760
    %807 = vmatpush.msra.mxu0 %v806
    %v808 = vand.u32 %v525, 4294901760
    %v809 = vsub.f32 %v525, %v808
    %v810 = vand.u32 %v809, 4294901760
    %811 = vmatmul.f32.gmra.mxu0 %v810
    %v812 = vpop.f32.mrf.mxu0
    %v813 = vadd.f32 %v759, %v812
    %v814 = vand.u32 %v526, 4294901760
    %v815 = vsub.f32 %v526, %v814
    %v816 = vand.u32 %v815, 4294901760
    %817 = vmatmul.f32.gmra.mxu0 %v816
    %v818 = vpop.f32.mrf.mxu0
    %v819 = vadd.f32 %v764, %v818
    %v820 = vand.u32 %v527, 4294901760
    %v821 = vsub.f32 %v527, %v820
    %v822 = vand.u32 %v821, 4294901760
    %823 = vmatmul.f32.gmra.mxu0 %v822
    %v824 = vpop.f32.mrf.mxu0
    %v825 = vadd.f32 %v769, %v824
    %v826 = vand.u32 %v528, 4294901760
    %v827 = vsub.f32 %v528, %v826
    %v828 = vand.u32 %v827, 4294901760
    %829 = vmatmul.f32.gmra.mxu0 %v828
    %v830 = vpop.f32.mrf.mxu0
    %v831 = vadd.f32 %v774, %v830
    %832 = vdwg.mxu0
    %v833 = vand.u32 %v82, 4294901760
    %v834 = vsub.f32 %v82, %v833
    %v835 = vand.u32 %v834, 4294901760
    %836 = vmatpush.msra.mxu0 %v835
    %v837 = vand.u32 %v81, 4294901760
    %v838 = vsub.f32 %v81, %v837
    %v839 = vand.u32 %v838, 4294901760
    %840 = vmatpush.msra.mxu0 %v839
    %v841 = vand.u32 %v80, 4294901760
    %v842 = vsub.f32 %v80, %v841
    %v843 = vand.u32 %v842, 4294901760
    %844 = vmatpush.msra.mxu0 %v843
    %v845 = vand.u32 %v79, 4294901760
    %v846 = vsub.f32 %v79, %v845
    %v847 = vand.u32 %v846, 4294901760
    %848 = vmatpush.msra.mxu0 %v847
    %v849 = vand.u32 %v78, 4294901760
    %v850 = vsub.f32 %v78, %v849
    %v851 = vand.u32 %v850, 4294901760
    %852 = vmatpush.msra.mxu0 %v851
    %v853 = vand.u32 %v77, 4294901760
    %v854 = vsub.f32 %v77, %v853
    %v855 = vand.u32 %v854, 4294901760
    %856 = vmatpush.msra.mxu0 %v855
    %v857 = vand.u32 %v76, 4294901760
    %v858 = vsub.f32 %v76, %v857
    %v859 = vand.u32 %v858, 4294901760
    %860 = vmatpush.msra.mxu0 %v859
    %v861 = vand.u32 %v75, 4294901760
    %v862 = vsub.f32 %v75, %v861
    %v863 = vand.u32 %v862, 4294901760
    %864 = vmatpush.msra.mxu0 %v863
    %v865 = vand.u32 %v74, 4294901760
    %v866 = vsub.f32 %v74, %v865
    %v867 = vand.u32 %v866, 4294901760
    %868 = vmatpush.msra.mxu0 %v867
    %v869 = vand.u32 %v73, 4294901760
    %v870 = vsub.f32 %v73, %v869
    %v871 = vand.u32 %v870, 4294901760
    %872 = vmatpush.msra.mxu0 %v871
    %v873 = vand.u32 %v72, 4294901760
    %v874 = vsub.f32 %v72, %v873
    %v875 = vand.u32 %v874, 4294901760
    %876 = vmatpush.msra.mxu0 %v875
    %v877 = vand.u32 %v71, 4294901760
    %v878 = vsub.f32 %v71, %v877
    %v879 = vand.u32 %v878, 4294901760
    %880 = vmatpush.msra.mxu0 %v879
    %v881 = vand.u32 %v70, 4294901760
    %v882 = vsub.f32 %v70, %v881
    %v883 = vand.u32 %v882, 4294901760
    %884 = vmatpush.msra.mxu0 %v883
    %v885 = vand.u32 %v69, 4294901760
    %v886 = vsub.f32 %v69, %v885
    %v887 = vand.u32 %v886, 4294901760
    %888 = vmatpush.msra.mxu0 %v887
    %v889 = vand.u32 %v68, 4294901760
    %v890 = vsub.f32 %v68, %v889
    %v891 = vand.u32 %v890, 4294901760
    %892 = vmatpush.msra.mxu0 %v891
    %v893 = vand.u32 %v67, 4294901760
    %v894 = vsub.f32 %v67, %v893
    %v895 = vand.u32 %v894, 4294901760
    %896 = vmatpush.msra.mxu0 %v895
    %v897 = vand.u32 %v525, 4294901760
    %898 = vmatmul.f32.gmra.mxu0 %v897
    %v899 = vpop.f32.mrf.mxu0
    %v900 = vadd.f32 %v813, %v899
    %v901 = vand.u32 %v526, 4294901760
    %902 = vmatmul.f32.gmra.mxu0 %v901
    %v903 = vpop.f32.mrf.mxu0
    %v904 = vadd.f32 %v819, %v903
    %v905 = vand.u32 %v527, 4294901760
    %906 = vmatmul.f32.gmra.mxu0 %v905
    %v907 = vpop.f32.mrf.mxu0
    %v908 = vadd.f32 %v825, %v907
    %v909 = vand.u32 %v528, 4294901760
    %910 = vmatmul.f32.gmra.mxu0 %v909
    %v911 = vpop.f32.mrf.mxu0
    %v912 = vadd.f32 %v831, %v911
    %913 = vdwg.mxu0
    %v914 = vand.u32 %v82, 4294901760
    %915 = vmatpush.msra.mxu0 %v914
    %v916 = vand.u32 %v81, 4294901760
    %917 = vmatpush.msra.mxu0 %v916
    %v918 = vand.u32 %v80, 4294901760
    %919 = vmatpush.msra.mxu0 %v918
    %v920 = vand.u32 %v79, 4294901760
    %921 = vmatpush.msra.mxu0 %v920
    %v922 = vand.u32 %v78, 4294901760
    %923 = vmatpush.msra.mxu0 %v922
    %v924 = vand.u32 %v77, 4294901760
    %925 = vmatpush.msra.mxu0 %v924
    %v926 = vand.u32 %v76, 4294901760
    %927 = vmatpush.msra.mxu0 %v926
    %v928 = vand.u32 %v75, 4294901760
    %929 = vmatpush.msra.mxu0 %v928
    %v930 = vand.u32 %v74, 4294901760
    %931 = vmatpush.msra.mxu0 %v930
    %v932 = vand.u32 %v73, 4294901760
    %933 = vmatpush.msra.mxu0 %v932
    %v934 = vand.u32 %v72, 4294901760
    %935 = vmatpush.msra.mxu0 %v934
    %v936 = vand.u32 %v71, 4294901760
    %937 = vmatpush.msra.mxu0 %v936
    %v938 = vand.u32 %v70, 4294901760
    %939 = vmatpush.msra.mxu0 %v938
    %v940 = vand.u32 %v69, 4294901760
    %941 = vmatpush.msra.mxu0 %v940
    %v942 = vand.u32 %v68, 4294901760
    %943 = vmatpush.msra.mxu0 %v942
    %v944 = vand.u32 %v67, 4294901760
    %945 = vmatpush.msra.mxu0 %v944
    %v946 = vand.u32 %v525, 4294901760
    %947 = vmatmul.f32.gmra.mxu0 %v946
    %v948 = vpop.f32.mrf.mxu0
    %v949 = vadd.f32 %v900, %v948
    %v950 = vand.u32 %v526, 4294901760
    %951 = vmatmul.f32.gmra.mxu0 %v950
    %v952 = vpop.f32.mrf.mxu0
    %v953 = vadd.f32 %v904, %v952
    %v954 = vand.u32 %v527, 4294901760
    %955 = vmatmul.f32.gmra.mxu0 %v954
    %v956 = vpop.f32.mrf.mxu0
    %v957 = vadd.f32 %v908, %v956
    %v958 = vand.u32 %v528, 4294901760
    %959 = vmatmul.f32.gmra.mxu0 %v958
    %v960 = vpop.f32.mrf.mxu0
    %v961 = vadd.f32 %v912, %v960
    %962 = vdwg.mxu0
    %v963 = vmul.f32 %v949, 0.03125
    %v964 = vmul.f32 %v953, 0.03125
    %v965 = vmul.f32 %v957, 0.03125
    %v966 = vmul.f32 %v961, 0.03125
    %v967 = vadd.f32 %v963, 1e-05
    %v968 = vadd.f32 %v964, 1e-05
    %v969 = vadd.f32 %v965, 1e-05
    %v970 = vadd.f32 %v966, 1e-05
    %v971 = vrsqrt.pop %v967
    %v972 = vmul.f32 %v971, %v967
    %v973 = vmul.f32 %v972, %v971
    %v974 = vmul.f32 0.5, %v973
    %v975 = vsub.f32 1.5, %v974
    %v976 = vmul.f32 %v971, %v975
    %vm977 = vweird.f32 %v967
    %vm978 = vweird.f32 %v971
    %vm979 = vmor %vm977, %vm978
    %v980 = vsel %vm979, %v971, %v976
    %v981 = vrsqrt.pop %v968
    %v982 = vmul.f32 %v981, %v968
    %v983 = vmul.f32 %v982, %v981
    %v984 = vmul.f32 0.5, %v983
    %v985 = vsub.f32 1.5, %v984
    %v986 = vmul.f32 %v981, %v985
    %vm987 = vweird.f32 %v968
    %vm988 = vweird.f32 %v981
    %vm989 = vmor %vm987, %vm988
    %v990 = vsel %vm989, %v981, %v986
    %v991 = vrsqrt.pop %v969
    %v992 = vmul.f32 %v991, %v969
    %v993 = vmul.f32 %v992, %v991
    %v994 = vmul.f32 0.5, %v993
    %v995 = vsub.f32 1.5, %v994
    %v996 = vmul.f32 %v991, %v995
    %vm997 = vweird.f32 %v969
    %vm998 = vweird.f32 %v991
    %vm999 = vmor %vm997, %vm998
    %v1000 = vsel %vm999, %v991, %v996
    %v1001 = vrsqrt.pop %v970
    %v1002 = vmul.f32 %v1001, %v970
    %v1003 = vmul.f32 %v1002, %v1001
    %v1004 = vmul.f32 0.5, %v1003
    %v1005 = vsub.f32 1.5, %v1004
    %v1006 = vmul.f32 %v1001, %v1005
    %vm1007 = vweird.f32 %v970
    %vm1008 = vweird.f32 %v1001
    %vm1009 = vmor %vm1007, %vm1008
    %v1010 = vsel %vm1009, %v1001, %v1006
    %v1011 = vld [vmem:[#allocation5] sm:$0x1]
    %v1012 = vld [vmem:[%s2] sm:$0x1]
    %v1013 = vmul.f32 %v521, %v980
    %v1014 = vmul.f32 %v522, %v990
    %v1015 = vmul.f32 %v523, %v1000
    %v1016 = vmul.f32 %v524, %v1010
    %v1018 = vperm.slane %v1011, 0
    %v1020 = vmul.f32 %v1013, %v1018
    %v1021 = vmul.f32 %v1014, %v1018
    %v1022 = vmul.f32 %v1015, %v1018
    %v1023 = vmul.f32 %v1016, %v1018
    %v1025 = vperm.slane %v1012, 0
    %v1027 = vadd.f32 %v1020, %v1025
    %v1028 = vadd.f32 %v1021, %v1025
    %v1029 = vadd.f32 %v1022, %v1025
    %v1030 = vadd.f32 %v1023, %v1025
    %1031 = vst [vmem:[#allocation8] sm:$0xff] %v1027
    %1032 = vst [vmem:[#allocation8 + $0x8] sm:$0xff] %v1028
    %1033 = vst [vmem:[#allocation8 + $0x10] sm:$0xff] %v1029
    %1034 = vst [vmem:[#allocation8 + $0x18] sm:$0xff] %v1030
    // Predicated region
    $region30: #{tpu_custom_call.1} parent=1 // pred_check
      _
    $region31: #{tpu_custom_call.1} parent=1 // pred_check_branch
      %1036 = sbr.rel (0) target = $region33
    $region32: #{tpu_custom_call.1} parent=1 // pred_region
      %1038 = vsyncadd [#allocation4], 0
      %s1039 = sshll.u32 [#allocation8], 4
      %s1040 = int_to_ptr.vmem [resolvable:$true] %s1039
      %s1041 = sshll.u32 %s4, 4
      %s1042 = int_to_ptr.hbm [resolvable:$true] %s1041
      %1047 = dma.vmem_to_hbm [thread:$0]  %s1040, 512, %s1042, [#allocation4], 128, 128, 8
    $region33: #{tpu_custom_call.1} parent=1 // pred_fallthru
      _
    // Predicated region
    $region34: #{tpu_custom_call.1} parent=1 // pred_check
      _
    $region35: #{tpu_custom_call.1} parent=1 // pred_check_branch
      %1049 = sbr.rel (0) target = $region37
    $region36: #{tpu_custom_call.1} parent=1 // pred_region
      %1051 = dma.done [#allocation4], 512
    $region37: #{tpu_custom_call.1} parent=1 // pred_fallthru
      _
    %1052 = vsyncpa [#allocation3], 1
    %1053 = vsyncpa [#allocation6], 1
    %1054 = vsyncpa [#allocation4], 1

</llo_original>
